<compile_context>
chip_gen: v5e
topology: v5e:2x2
jax: 0.10.0
libtpu: 0.0.40
codegen_flags: <defaults>
</compile_context>

<pallas_src>
import jax
import jax.numpy as jnp
import numpy as np
from jax.experimental import pallas as pl
from jax.experimental.pallas import tpu as pltpu

# --- model hyperparameters (from the PyTorch module) -----------------------
n_embd     = 32
block_size = 8
num_heads  = 4
head_size  = n_embd // num_heads   # 8
vocab_size = 65                    # len(chars) in the original script

VOCAB_PAD = 128                    # lane-dense padded lm_head width
_NEG      = -1e30                  # finite masked-fill value (underflows to exactly 0)


def slm_kernel(x_ref, stack_ref, slab_ref, mask_ref, out_ref):
    """(B, T, D) embeddings -> (B, T, VOCAB_PAD) logits, one grid step."""
    B, T, D = x_ref.shape
    M = B * T
    nh, hs = num_heads, head_size
    Vp = out_ref.shape[-1]

    xm = x_ref[...].reshape(M, D)                              # (M, D)

    stack = stack_ref[...]                                     # (4*nh, D, hs)
    w_qkv = stack[0:3 * nh]                                    # Wq*scale | Wk | Wv per head
    w_ffT = stack[3 * nh:4 * nh]                               # per-head Wf block, transposed

    w_lm = slab_ref[0:D, :]                                    # (D, Vp)
    b_ff = slab_ref[D:D + 1, 0:D]                              # (1, D)
    b_lm = slab_ref[D + 8:D + 9, :]                            # (1, Vp)

    # --- QKV for all heads in one batched contraction (attention scale folded into Wq)
    xb = jnp.broadcast_to(xm[None, :, :], (3 * nh, M, D))      # (3*nh, M, D)
    qkv = jnp.einsum('hmd,hdk->hmk', xb, w_qkv,
                     preferred_element_type=jnp.float32)       # (3*nh, M, hs)
    q = qkv[0:nh]                                              # (nh, M, hs)
    k = qkv[nh:2 * nh]
    v = qkv[2 * nh:3 * nh]

    # --- merged scores: batch folded into rows, additive block-diag causal mask
    s = jnp.einsum('hmd,hnd->hmn', q, k,
                   preferred_element_type=jnp.float32)         # (nh, M, M)
    s = s + mask_ref[...][None, :, :]                          # 0 / -1e30 additive mask

    # one softmax pass over all heads (exact denominator)
    s = s - jnp.max(s, axis=-1, keepdims=True)
    p = jnp.exp(s)
    p = p / jnp.sum(p, axis=-1, keepdims=True)

    o = jnp.einsum('hmn,hnd->hmd', p, v,
                   preferred_element_type=jnp.float32)         # (nh, M, hs)

    # --- FeedForward: attn @ Wf == sum_h o_h @ Wf_h  (head concat fused away)
    ff_parts = jnp.einsum('hmd,hnd->hmn', o, w_ffT,
                          preferred_element_type=jnp.float32)  # (nh, M, D)
    ff = ff_parts[0]
    for h in range(1, nh):
        ff = ff + ff_parts[h]
    ff = jnp.maximum(ff + b_ff, 0.0)                           # (M, D)

    # --- lm_head (lane-dense padded output)
    logits = jnp.dot(ff, w_lm, preferred_element_type=jnp.float32) + b_lm
    out_ref[...] = logits.reshape(B, T, Vp)


def prepare_params(params):
    """One-time weight preprocessing (hoisted out of the per-call forward)."""
    scale = float(n_embd) ** (-0.5)
    hs = head_size
    blocks = []
    for h in range(num_heads):                                   # Wq per head, scale folded
        blocks.append(params["wq"][:, h * hs:(h + 1) * hs] * scale)
    for h in range(num_heads):                                   # Wk per head
        blocks.append(params["wk"][:, h * hs:(h + 1) * hs])
    for h in range(num_heads):                                   # Wv per head
        blocks.append(params["wv"][:, h * hs:(h + 1) * hs])
    for h in range(num_heads):                                   # Wf block per head, transposed
        blocks.append(params["wf"][h * hs:(h + 1) * hs, :].T)
    stack = jnp.stack(blocks, axis=0)                            # (4*nh, n_embd, head_size)

    slab = jnp.zeros((n_embd + 16, VOCAB_PAD), jnp.float32)
    slab = slab.at[0:n_embd, 0:vocab_size].set(params["wl"])      # lm_head weight (padded)
    slab = slab.at[n_embd, 0:n_embd].set(params["bf"][0])         # ff bias
    slab = slab.at[n_embd + 8, 0:vocab_size].set(params["bl"][0]) # lm_head bias (padded)

    return {"tok_table": params["tok_table"],
            "pos_table": params["pos_table"],
            "stack": stack, "slab": slab}


def _block_causal_additive_mask(B, T):
    """(B*T, B*T) additive mask: 0 where same-sequence AND causal, else -1e30."""
    idx = np.arange(B * T)
    ok = (idx[:, None] >= idx[None, :]) & ((idx[:, None] // T) == (idx[None, :] // T))
    return np.where(ok, 0.0, _NEG).astype(np.float32)


@jax.jit
def small_language_model_forward(ids, prep):
    """ids: (B, T) int32 token indices -> logits (B, T, vocab_size) f32."""
    B, T = ids.shape
    assert T <= block_size

    # TODO(synk): token/position gathers stay as JAX glue (one fused gather+add); the
    # loss path (targets != None) and generate()'s multinomial loop are host-side.
    x = prep["tok_table"][ids] + prep["pos_table"][:T]            # (B, T, D)
    mask = jnp.asarray(_block_causal_additive_mask(B, T))         # trace-time constant

    M = B * T
    full = lambda shape: pl.BlockSpec(shape, lambda i: (0,) * len(shape))

    logits_p = pl.pallas_call(
        slm_kernel,
        out_shape=jax.ShapeDtypeStruct((B, T, VOCAB_PAD), jnp.float32),
        grid_spec=pltpu.PrefetchScalarGridSpec(
            num_scalar_prefetch=0,
            grid=(1,),                                            # single step: overhead-bound
            in_specs=[
                pl.BlockSpec((B, T, n_embd), lambda i: (0, 0, 0)),    # x = tok_emb + pos_emb
                full((4 * num_heads, n_embd, head_size)),             # per-head weight stack
                full((n_embd + 16, VOCAB_PAD)),                       # lm_head / bias slab
                full((M, M)),                                         # additive causal mask
            ],
            out_specs=pl.BlockSpec((B, T, VOCAB_PAD), lambda i: (0, 0, 0)),
        ),
        compiler_params=pltpu.CompilerParams(
            dimension_semantics=("arbitrary",)),
    )(x, prep["stack"], prep["slab"], mask)

    return logits_p[:, :, :vocab_size]


def make_params(key):
    """Deterministic synthetic parameters (shapes from the module's __init__)."""
    ks = jax.random.split(key, 9)
    s = 0.1
    return {
        "tok_table": jax.random.normal(ks[0], (vocab_size, n_embd), jnp.float32) * s,
        "pos_table": jax.random.normal(ks[1], (block_size, n_embd), jnp.float32) * s,
        # per-head q/k/v weights packed as (n_embd, num_heads*head_size); y = x @ W
        "wq": jax.random.normal(ks[2], (n_embd, n_embd), jnp.float32) * s,
        "wk": jax.random.normal(ks[3], (n_embd, n_embd), jnp.float32) * s,
        "wv": jax.random.normal(ks[4], (n_embd, n_embd), jnp.float32) * s,
        # FeedForward: Linear(n_embd, n_embd) + ReLU
        "wf": jax.random.normal(ks[5], (n_embd, n_embd), jnp.float32) * s,
        "bf": jax.random.normal(ks[6], (1, n_embd), jnp.float32) * s,
        # lm_head: Linear(n_embd, vocab_size)
        "wl": jax.random.normal(ks[7], (n_embd, vocab_size), jnp.float32) * s,
        "bl": jax.random.normal(ks[8], (1, vocab_size), jnp.float32) * s,
    }


def reference_forward(ids, params):
    """Pure-JAX reference mirroring the PyTorch forward exactly."""
    B, T = ids.shape
    x = params["tok_table"][ids] + params["pos_table"][:T]          # (B, T, D)
    scale = float(n_embd) ** (-0.5)                                  # C**-0.5, C = n_embd
    mask = jnp.tril(jnp.ones((T, T), bool))
    heads = []
    for h in range(num_heads):
        sl = slice(h * head_size, (h + 1) * head_size)
        q = x @ params["wq"][:, sl]
        k = x @ params["wk"][:, sl]
        v = x @ params["wv"][:, sl]
        wei = jnp.einsum("btd,bsd->bts", q, k) * scale
        wei = jnp.where(mask, wei, -jnp.inf)
        wei = jax.nn.softmax(wei, axis=-1)
        heads.append(jnp.einsum("bts,bsd->btd", wei, v))
    attn = jnp.concatenate(heads, axis=-1)
    ff = jnp.maximum(attn @ params["wf"] + params["bf"][0], 0.0)
    return ff @ params["wl"] + params["bl"][0]


if __name__ == "__main__":
    key = jax.random.PRNGKey(0)
    pkey, ikey = jax.random.split(key)

    params = make_params(pkey)
    prep = prepare_params(params)            # one-time weight preprocessing

    B, T = 2, block_size
    ids = jax.random.randint(ikey, (B, T), 0, vocab_size, dtype=jnp.int32)

    logits = small_language_model_forward(ids, prep)
    logits = jax.block_until_ready(logits)

    ref = reference_forward(ids, params)
    assert logits.shape == (B, T, vocab_size)
    # tolerance covers MXU default-precision differences between kernel and XLA reference
    assert jnp.allclose(logits, ref, atol=2e-3, rtol=2e-3), "mismatch vs reference"

    print("KERNEL_OK")
</pallas_src>

<mosaic_0001>
module attributes {stable_mosaic.version = 11 : i64} {
  func.func @slm_kernel(%arg0: i32, %arg1: memref<2x8x32xf32, #tpu.memory_space<vmem>>, %arg2: memref<16x32x8xf32, #tpu.memory_space<vmem>>, %arg3: memref<48x128xf32, #tpu.memory_space<vmem>>, %arg4: memref<16x16xf32, #tpu.memory_space<vmem>>, %arg5: memref<2x8x128xf32, #tpu.memory_space<vmem>>) attributes {dimension_semantics = [#tpu.dimension_semantics<arbitrary>], iteration_bounds = array<i64: 1>, scalar_prefetch = 0 : i64, scratch_operands = 0 : i64, tpu.core_type = #tpu.core_type<tc>, window_params = [{pipeline_mode = #tpu.pipeline_mode<synchronous>, transform_indices = @transform_0, window_bounds = array<i64: 2, 8, 32>}, {pipeline_mode = #tpu.pipeline_mode<synchronous>, transform_indices = @transform_1, window_bounds = array<i64: 16, 32, 8>}, {pipeline_mode = #tpu.pipeline_mode<synchronous>, transform_indices = @transform_2, window_bounds = array<i64: 48, 128>}, {pipeline_mode = #tpu.pipeline_mode<synchronous>, transform_indices = @transform_3, window_bounds = array<i64: 16, 16>}, {pipeline_mode = #tpu.pipeline_mode<synchronous>, transform_indices = @transform_4, window_bounds = array<i64: 2, 8, 128>}]} {
    %c0 = arith.constant 0 : index
    %c0_0 = arith.constant 0 : index
    %c0_1 = arith.constant 0 : index
    %0 = vector.load %arg1[%c0, %c0_0, %c0_1] : memref<2x8x32xf32, #tpu.memory_space<vmem>>, vector<2x8x32xf32>
    %1 = vector.shape_cast %0 : vector<2x8x32xf32> to vector<16x32xf32>
    %c0_2 = arith.constant 0 : index
    %c0_3 = arith.constant 0 : index
    %c0_4 = arith.constant 0 : index
    %2 = vector.load %arg2[%c0_2, %c0_3, %c0_4] : memref<16x32x8xf32, #tpu.memory_space<vmem>>, vector<16x32x8xf32>
    %3 = vector.extract_strided_slice %2 {offsets = [0, 0, 0], sizes = [12, 32, 8], strides = [1, 1, 1]} : vector<16x32x8xf32> to vector<12x32x8xf32>
    %4 = vector.extract_strided_slice %2 {offsets = [12, 0, 0], sizes = [4, 32, 8], strides = [1, 1, 1]} : vector<16x32x8xf32> to vector<4x32x8xf32>
    %c0_5 = arith.constant 0 : index
    %c0_6 = arith.constant 0 : index
    %5 = vector.load %arg3[%c0_5, %c0_6] : memref<48x128xf32, #tpu.memory_space<vmem>>, vector<32x128xf32>
    %c32 = arith.constant 32 : index
    %c0_7 = arith.constant 0 : index
    %6 = vector.load %arg3[%c32, %c0_7] : memref<48x128xf32, #tpu.memory_space<vmem>>, vector<1x32xf32>
    %c40 = arith.constant 40 : index
    %c0_8 = arith.constant 0 : index
    %7 = vector.load %arg3[%c40, %c0_8] : memref<48x128xf32, #tpu.memory_space<vmem>>, vector<1x128xf32>
    %8 = vector.shape_cast %1 : vector<16x32xf32> to vector<1x16x32xf32>
    %9 = vector.shape_cast %8 : vector<1x16x32xf32> to vector<1x16x32xf32>
    %10 = vector.broadcast %9 : vector<1x16x32xf32> to vector<12x16x32xf32>
    "tpu.trace_start"() <{level = 10 : i32, message = "hmd,hdk->hmk"}> : () -> ()
    %cst = arith.constant dense<0.000000e+00> : vector<12x16x8xf32>
    %11 = tpu.matmul %10, %3, %cst {dimension_numbers = #tpu.dot_dimension_numbers<[2], [1], [1], [2], [0, 0, 0, 1, 1, 2], [0], [0]>} : vector<12x16x32xf32>, vector<12x32x8xf32>, vector<12x16x8xf32> -> vector<12x16x8xf32>
    "tpu.trace_stop"() : () -> ()
    %12 = vector.extract_strided_slice %11 {offsets = [0, 0, 0], sizes = [4, 16, 8], strides = [1, 1, 1]} : vector<12x16x8xf32> to vector<4x16x8xf32>
    %13 = vector.extract_strided_slice %11 {offsets = [4, 0, 0], sizes = [4, 16, 8], strides = [1, 1, 1]} : vector<12x16x8xf32> to vector<4x16x8xf32>
    %14 = vector.extract_strided_slice %11 {offsets = [8, 0, 0], sizes = [4, 16, 8], strides = [1, 1, 1]} : vector<12x16x8xf32> to vector<4x16x8xf32>
    "tpu.trace_start"() <{level = 10 : i32, message = "hmd,hnd->hmn"}> : () -> ()
    %cst_9 = arith.constant dense<0.000000e+00> : vector<4x16x16xf32>
    %15 = tpu.matmul %12, %13, %cst_9 {dimension_numbers = #tpu.dot_dimension_numbers<[2], [2], [1], [1], [0, 0, 0, 1, 1, 1], [0], [0]>} : vector<4x16x8xf32>, vector<4x16x8xf32>, vector<4x16x16xf32> -> vector<4x16x16xf32>
    "tpu.trace_stop"() : () -> ()
    %c0_10 = arith.constant 0 : index
    %c0_11 = arith.constant 0 : index
    %16 = vector.load %arg4[%c0_10, %c0_11] : memref<16x16xf32, #tpu.memory_space<vmem>>, vector<16x16xf32>
    %17 = vector.shape_cast %16 : vector<16x16xf32> to vector<1x16x16xf32>
    %18 = vector.broadcast %17 : vector<1x16x16xf32> to vector<4x16x16xf32>
    %19 = arith.addf %15, %18 : vector<4x16x16xf32>
    %cst_12 = arith.constant dense<0xFF800000> : vector<4x16xf32>
    %20 = vector.multi_reduction <maximumf>, %19, %cst_12 [2] : vector<4x16x16xf32> to vector<4x16xf32>
    %21 = vector.shape_cast %20 : vector<4x16xf32> to vector<4x16x1xf32>
    %22 = vector.broadcast %21 : vector<4x16x1xf32> to vector<4x16x16xf32>
    %23 = arith.subf %19, %22 : vector<4x16x16xf32>
    %24 = math.exp %23 : vector<4x16x16xf32>
    %cst_13 = arith.constant dense<0.000000e+00> : vector<4x16xf32>
    %25 = vector.multi_reduction <add>, %24, %cst_13 [2] : vector<4x16x16xf32> to vector<4x16xf32>
    %26 = vector.shape_cast %25 : vector<4x16xf32> to vector<4x16x1xf32>
    %27 = vector.broadcast %26 : vector<4x16x1xf32> to vector<4x16x16xf32>
    %28 = arith.divf %24, %27 : vector<4x16x16xf32>
    "tpu.trace_start"() <{level = 10 : i32, message = "hmn,hnd->hmd"}> : () -> ()
    %cst_14 = arith.constant dense<0.000000e+00> : vector<4x16x8xf32>
    %29 = tpu.matmul %28, %14, %cst_14 {dimension_numbers = #tpu.dot_dimension_numbers<[2], [1], [1], [2], [0, 0, 0, 1, 1, 2], [0], [0]>} : vector<4x16x16xf32>, vector<4x16x8xf32>, vector<4x16x8xf32> -> vector<4x16x8xf32>
    "tpu.trace_stop"() : () -> ()
    "tpu.trace_start"() <{level = 10 : i32, message = "hmd,hnd->hmn"}> : () -> ()
    %cst_15 = arith.constant dense<0.000000e+00> : vector<4x16x32xf32>
    %30 = tpu.matmul %29, %4, %cst_15 {dimension_numbers = #tpu.dot_dimension_numbers<[2], [2], [1], [1], [0, 0, 0, 1, 1, 1], [0], [0]>} : vector<4x16x8xf32>, vector<4x32x8xf32>, vector<4x16x32xf32> -> vector<4x16x32xf32>
    "tpu.trace_stop"() : () -> ()
    %31 = vector.extract_strided_slice %30 {offsets = [0, 0, 0], sizes = [1, 16, 32], strides = [1, 1, 1]} : vector<4x16x32xf32> to vector<1x16x32xf32>
    %32 = vector.shape_cast %31 : vector<1x16x32xf32> to vector<16x32xf32>
    %33 = vector.extract_strided_slice %30 {offsets = [1, 0, 0], sizes = [1, 16, 32], strides = [1, 1, 1]} : vector<4x16x32xf32> to vector<1x16x32xf32>
    %34 = vector.shape_cast %33 : vector<1x16x32xf32> to vector<16x32xf32>
    %35 = arith.addf %32, %34 : vector<16x32xf32>
    %36 = vector.extract_strided_slice %30 {offsets = [2, 0, 0], sizes = [1, 16, 32], strides = [1, 1, 1]} : vector<4x16x32xf32> to vector<1x16x32xf32>
    %37 = vector.shape_cast %36 : vector<1x16x32xf32> to vector<16x32xf32>
    %38 = arith.addf %35, %37 : vector<16x32xf32>
    %39 = vector.extract_strided_slice %30 {offsets = [3, 0, 0], sizes = [1, 16, 32], strides = [1, 1, 1]} : vector<4x16x32xf32> to vector<1x16x32xf32>
    %40 = vector.shape_cast %39 : vector<1x16x32xf32> to vector<16x32xf32>
    %41 = arith.addf %38, %40 : vector<16x32xf32>
    %42 = vector.broadcast %6 : vector<1x32xf32> to vector<16x32xf32>
    %43 = arith.addf %41, %42 : vector<16x32xf32>
    %cst_16 = arith.constant 0.000000e+00 : f32
    %44 = vector.broadcast %cst_16 : f32 to vector<16x32xf32>
    %45 = arith.maximumf %43, %44 : vector<16x32xf32>
    %cst_17 = arith.constant dense<0.000000e+00> : vector<16x128xf32>
    %46 = tpu.matmul %45, %5, %cst_17 {dimension_numbers = #tpu.dot_dimension_numbers<[1], [0], [0], [1], [0, 0, 1, 1], [], []>} : vector<16x32xf32>, vector<32x128xf32>, vector<16x128xf32> -> vector<16x128xf32>
    %47 = vector.broadcast %7 : vector<1x128xf32> to vector<16x128xf32>
    %48 = arith.addf %46, %47 : vector<16x128xf32>
    %49 = vector.shape_cast %48 : vector<16x128xf32> to vector<2x8x128xf32>
    %c0_18 = arith.constant 0 : index
    %c0_19 = arith.constant 0 : index
    %c0_20 = arith.constant 0 : index
    %50 = vector.load %arg5[%c0_18, %c0_19, %c0_20] : memref<2x8x128xf32, #tpu.memory_space<vmem>>, vector<2x8x128xf32>
    tpu.vector_store %arg5[%c0_18, %c0_19, %c0_20], %49 {strides = array<i32>} : memref<2x8x128xf32, #tpu.memory_space<vmem>>, vector<2x8x128xf32>,
    return
  }
  func.func @transform_0(%arg0: i32) -> (i32, i32, i32) {
    %c0_i32 = arith.constant 0 : i32
    %c0_i32_0 = arith.constant 0 : i32
    %c0_i32_1 = arith.constant 0 : i32
    %c0_i32_2 = arith.constant 0 : i32
    return %c0_i32, %c0_i32_0, %c0_i32_1 : i32, i32, i32
  }
  func.func @transform_1(%arg0: i32) -> (i32, i32, i32) {
    %c0_i32 = arith.constant 0 : i32
    %c0_i32_0 = arith.constant 0 : i32
    %c0_i32_1 = arith.constant 0 : i32
    %c0_i32_2 = arith.constant 0 : i32
    return %c0_i32, %c0_i32_0, %c0_i32_1 : i32, i32, i32
  }
  func.func @transform_2(%arg0: i32) -> (i32, i32) {
    %c0_i32 = arith.constant 0 : i32
    %c0_i32_0 = arith.constant 0 : i32
    %c0_i32_1 = arith.constant 0 : i32
    return %c0_i32, %c0_i32_0 : i32, i32
  }
  func.func @transform_3(%arg0: i32) -> (i32, i32) {
    %c0_i32 = arith.constant 0 : i32
    %c0_i32_0 = arith.constant 0 : i32
    %c0_i32_1 = arith.constant 0 : i32
    return %c0_i32, %c0_i32_0 : i32, i32
  }
  func.func @transform_4(%arg0: i32) -> (i32, i32, i32) {
    %c0_i32 = arith.constant 0 : i32
    %c0_i32_0 = arith.constant 0 : i32
    %c0_i32_1 = arith.constant 0 : i32
    %c0_i32_2 = arith.constant 0 : i32
    return %c0_i32, %c0_i32_0, %c0_i32_1 : i32, i32, i32
  }
}

</mosaic_0001>

<llo_original>
// kernel: small_language_model_forward.1
$region0: #{small_language_model_forward.1}
  #allocation0 [shape = 'u32[]', space=smem, size = 0x4, offset = 0x4, fixed_abs, tag = 'smem constant byte address 0x4 - core index']
  #allocation1 [shape = 'u32[72,128]{1,0:T(1,128)}', space=vmem, size = 0x9000, scoped, tag = 'internal scratch']
  %s0 = inlined_call_operand.vmem [shape: f32[2,8,32], index: 0, kind: input, shape index: {}]
  %s1 = inlined_call_operand.vmem [shape: f32[16,32,8], index: 1, kind: input, shape index: {}]
  %s2 = inlined_call_operand.vmem [shape: f32[48,128], index: 2, kind: input, shape index: {}]
  %s3 = inlined_call_operand.vmem [shape: f32[16,16], index: 3, kind: input, shape index: {}]
  %s4 = inlined_call_operand.hbm [shape: f32[2,8,128], index: 4, kind: output, shape index: {}]
  %s5 = sld [smem:[#allocation0]]
  $region26: #{small_language_model_forward.1} parent=0
    _
  %s7 = ssub.s32 1, %s5
  %s8 = scalar_select 0, %s7, %s5
  $region1: #{small_language_model_forward.1} parent=0
    #allocation2 [shape = 'u8[8192]{0}', space=vmem, size = 0x2000, scoped, tag = 'output window, operand 0, single buffered']
    #allocation3 [shape = 's32[1]{0}', space=sflag, size = 0x4, scoped, tag = 'scoped memory for small_language_model_forward.1']
    %9 = vsyncpa [#allocation3], 0
    // Predicated region
    $region2: #{small_language_model_forward.1} parent=1 // pred_check
      _
    $region3: #{small_language_model_forward.1} parent=1 // pred_check_branch
      %11 = sbr.rel (0) target = $region5
    $region4: #{small_language_model_forward.1} parent=1 // pred_region
      _
    $region5: #{small_language_model_forward.1} parent=1 // pred_fallthru
      _
    // Predicated region
    $region6: #{small_language_model_forward.1} parent=1 // pred_check
      _
    $region7: #{small_language_model_forward.1} parent=1 // pred_check_branch
      %13 = sbr.rel (0) target = $region9
    $region8: #{small_language_model_forward.1} parent=1 // pred_region
      _
    $region9: #{small_language_model_forward.1} parent=1 // pred_fallthru
      _
    // Predicated region
    $region10: #{small_language_model_forward.1} parent=1 // pred_check
      _
    $region11: #{small_language_model_forward.1} parent=1 // pred_check_branch
      %15 = sbr.rel (0) target = $region13
    $region12: #{small_language_model_forward.1} parent=1 // pred_region
      _
    $region13: #{small_language_model_forward.1} parent=1 // pred_fallthru
      _
    // Predicated region
    $region14: #{small_language_model_forward.1} parent=1 // pred_check
      _
    $region15: #{small_language_model_forward.1} parent=1 // pred_check_branch
      %17 = sbr.rel (0) target = $region17
    $region16: #{small_language_model_forward.1} parent=1 // pred_region
      _
    $region17: #{small_language_model_forward.1} parent=1 // pred_fallthru
      _
    %v18 = vld [vmem:[%s0] sm:$0xff]
    %v19 = vld [vmem:[%s0 + $0x8] sm:$0xff]
    %v20 = vld [vmem:[%s1] sm:$0xff]
    %v21 = vld [vmem:[%s1 + $0x8] sm:$0xff]
    %v22 = vld [vmem:[%s1 + $0x10] sm:$0xff]
    %v23 = vld [vmem:[%s1 + $0x18] sm:$0xff]
    %v24 = vld [vmem:[%s1 + $0x20] sm:$0xff]
    %v25 = vld [vmem:[%s1 + $0x28] sm:$0xff]
    %v26 = vld [vmem:[%s1 + $0x30] sm:$0xff]
    %v27 = vld [vmem:[%s1 + $0x38] sm:$0xff]
    %v28 = vld [vmem:[%s1 + $0x40] sm:$0xff]
    %v29 = vld [vmem:[%s1 + $0x48] sm:$0xff]
    %v30 = vld [vmem:[%s1 + $0x50] sm:$0xff]
    %v31 = vld [vmem:[%s1 + $0x58] sm:$0xff]
    %v32 = vld [vmem:[%s1 + $0x60] sm:$0xff]
    %v33 = vld [vmem:[%s1 + $0x68] sm:$0xff]
    %v34 = vld [vmem:[%s1 + $0x70] sm:$0xff]
    %v35 = vld [vmem:[%s1 + $0x78] sm:$0xff]
    %v36 = vld [vmem:[%s1 + $0x80] sm:$0xff]
    %v37 = vld [vmem:[%s1 + $0x88] sm:$0xff]
    %v38 = vld [vmem:[%s1 + $0x90] sm:$0xff]
    %v39 = vld [vmem:[%s1 + $0x98] sm:$0xff]
    %v40 = vld [vmem:[%s1 + $0xa0] sm:$0xff]
    %v41 = vld [vmem:[%s1 + $0xa8] sm:$0xff]
    %v42 = vld [vmem:[%s1 + $0xb0] sm:$0xff]
    %v43 = vld [vmem:[%s1 + $0xb8] sm:$0xff]
    %v44 = vld [vmem:[%s1 + $0xc0] sm:$0xff]
    %v45 = vld [vmem:[%s1 + $0xc8] sm:$0xff]
    %v46 = vld [vmem:[%s1 + $0xd0] sm:$0xff]
    %v47 = vld [vmem:[%s1 + $0xd8] sm:$0xff]
    %v48 = vld [vmem:[%s1 + $0xe0] sm:$0xff]
    %v49 = vld [vmem:[%s1 + $0xe8] sm:$0xff]
    %v50 = vld [vmem:[%s1 + $0xf0] sm:$0xff]
    %v51 = vld [vmem:[%s1 + $0xf8] sm:$0xff]
    %v52 = vld [vmem:[%s1 + $0x100] sm:$0xff]
    %v53 = vld [vmem:[%s1 + $0x108] sm:$0xff]
    %v54 = vld [vmem:[%s1 + $0x110] sm:$0xff]
    %v55 = vld [vmem:[%s1 + $0x118] sm:$0xff]
    %v56 = vld [vmem:[%s1 + $0x120] sm:$0xff]
    %v57 = vld [vmem:[%s1 + $0x128] sm:$0xff]
    %v58 = vld [vmem:[%s1 + $0x130] sm:$0xff]
    %v59 = vld [vmem:[%s1 + $0x138] sm:$0xff]
    %v60 = vld [vmem:[%s1 + $0x140] sm:$0xff]
    %v61 = vld [vmem:[%s1 + $0x148] sm:$0xff]
    %v62 = vld [vmem:[%s1 + $0x150] sm:$0xff]
    %v63 = vld [vmem:[%s1 + $0x158] sm:$0xff]
    %v64 = vld [vmem:[%s1 + $0x160] sm:$0xff]
    %v65 = vld [vmem:[%s1 + $0x168] sm:$0xff]
    %v66 = vld [vmem:[%s1 + $0x170] sm:$0xff]
    %v67 = vld [vmem:[%s1 + $0x178] sm:$0xff]
    %v68 = vld [vmem:[%s1 + $0x180] sm:$0xff]
    %v69 = vld [vmem:[%s1 + $0x188] sm:$0xff]
    %v70 = vld [vmem:[%s1 + $0x190] sm:$0xff]
    %v71 = vld [vmem:[%s1 + $0x198] sm:$0xff]
    %v72 = vld [vmem:[%s1 + $0x1a0] sm:$0xff]
    %v73 = vld [vmem:[%s1 + $0x1a8] sm:$0xff]
    %v74 = vld [vmem:[%s1 + $0x1b0] sm:$0xff]
    %v75 = vld [vmem:[%s1 + $0x1b8] sm:$0xff]
    %v76 = vld [vmem:[%s1 + $0x1c0] sm:$0xff]
    %v77 = vld [vmem:[%s1 + $0x1c8] sm:$0xff]
    %v78 = vld [vmem:[%s1 + $0x1d0] sm:$0xff]
    %v79 = vld [vmem:[%s1 + $0x1d8] sm:$0xff]
    %v80 = vld [vmem:[%s1 + $0x1e0] sm:$0xff]
    %v81 = vld [vmem:[%s1 + $0x1e8] sm:$0xff]
    %v82 = vld [vmem:[%s1 + $0x1f0] sm:$0xff]
    %v83 = vld [vmem:[%s1 + $0x1f8] sm:$0xff]
    %v84 = vld [vmem:[%s2] sm:$0xff]
    %v85 = vld [vmem:[%s2 + $0x8] sm:$0xff]
    %v86 = vld [vmem:[%s2 + $0x10] sm:$0xff]
    %v87 = vld [vmem:[%s2 + $0x18] sm:$0xff]
    %v88 = vld [vmem:[%s2 + $0x20] sm:$0x1]
    %v89 = vld [vmem:[%s2 + $0x28] sm:$0x1]
    %vm90 = vcmask 261120
    %v92 = vsel %vm90, %v18, 0
    %v95 = vsel %vm90, %v19, 0
    %97 = vmatpush.msra.mxu0 0.0
    %98 = vmatpush.msra.mxu0 0.0
    %99 = vmatpush.msra.mxu0 0.0
    %100 = vmatpush.msra.mxu0 0.0
    %101 = vmatpush.msra.mxu0 0.0
    %102 = vmatpush.msra.mxu0 0.0
    %103 = vmatpush.msra.mxu0 0.0
    %104 = vmatpush.msra.mxu0 0.0
    %105 = vmatpush.msra.mxu0 0.0
    %106 = vmatpush.msra.mxu0 0.0
    %107 = vmatpush.msra.mxu0 0.0
    %108 = vmatpush.msra.mxu0 0.0
    %109 = vmatpush.msra.mxu0 %v23
    %110 = vmatpush.msra.mxu0 %v22
    %111 = vmatpush.msra.mxu0 %v21
    %112 = vmatpush.msra.mxu0 %v20
    %113 = vmatmul.f32.gmra.mxu0 %v92
    %v114 = vpop.f32.mrf.mxu0
    %v115 = vadd.f32 0.0, %v114
    %116 = vmatmul.f32.gmra.mxu0 %v95
    %v117 = vpop.f32.mrf.mxu0
    %v118 = vadd.f32 0.0, %v117
    %119 = vdwg.mxu0
    %120 = vmatpush.msra.mxu0 0.0
    %121 = vmatpush.msra.mxu0 0.0
    %122 = vmatpush.msra.mxu0 0.0
    %123 = vmatpush.msra.mxu0 0.0
    %124 = vmatpush.msra.mxu0 0.0
    %125 = vmatpush.msra.mxu0 0.0
    %126 = vmatpush.msra.mxu0 0.0
    %127 = vmatpush.msra.mxu0 0.0
    %128 = vmatpush.msra.mxu0 0.0
    %129 = vmatpush.msra.mxu0 0.0
    %130 = vmatpush.msra.mxu0 0.0
    %131 = vmatpush.msra.mxu0 0.0
    %132 = vmatpush.msra.mxu0 %v27
    %133 = vmatpush.msra.mxu0 %v26
    %134 = vmatpush.msra.mxu0 %v25
    %135 = vmatpush.msra.mxu0 %v24
    %136 = vmatmul.f32.gmra.mxu0 %v92
    %v137 = vpop.f32.mrf.mxu0
    %v138 = vadd.f32 0.0, %v137
    %139 = vmatmul.f32.gmra.mxu0 %v95
    %v140 = vpop.f32.mrf.mxu0
    %v141 = vadd.f32 0.0, %v140
    %142 = vdwg.mxu0
    %143 = vmatpush.msra.mxu0 0.0
    %144 = vmatpush.msra.mxu0 0.0
    %145 = vmatpush.msra.mxu0 0.0
    %146 = vmatpush.msra.mxu0 0.0
    %147 = vmatpush.msra.mxu0 0.0
    %148 = vmatpush.msra.mxu0 0.0
    %149 = vmatpush.msra.mxu0 0.0
    %150 = vmatpush.msra.mxu0 0.0
    %151 = vmatpush.msra.mxu0 0.0
    %152 = vmatpush.msra.mxu0 0.0
    %153 = vmatpush.msra.mxu0 0.0
    %154 = vmatpush.msra.mxu0 0.0
    %155 = vmatpush.msra.mxu0 %v31
    %156 = vmatpush.msra.mxu0 %v30
    %157 = vmatpush.msra.mxu0 %v29
    %158 = vmatpush.msra.mxu0 %v28
    %159 = vmatmul.f32.gmra.mxu0 %v92
    %v160 = vpop.f32.mrf.mxu0
    %v161 = vadd.f32 0.0, %v160
    %162 = vmatmul.f32.gmra.mxu0 %v95
    %v163 = vpop.f32.mrf.mxu0
    %v164 = vadd.f32 0.0, %v163
    %165 = vdwg.mxu0
    %166 = vmatpush.msra.mxu0 0.0
    %167 = vmatpush.msra.mxu0 0.0
    %168 = vmatpush.msra.mxu0 0.0
    %169 = vmatpush.msra.mxu0 0.0
    %170 = vmatpush.msra.mxu0 0.0
    %171 = vmatpush.msra.mxu0 0.0
    %172 = vmatpush.msra.mxu0 0.0
    %173 = vmatpush.msra.mxu0 0.0
    %174 = vmatpush.msra.mxu0 0.0
    %175 = vmatpush.msra.mxu0 0.0
    %176 = vmatpush.msra.mxu0 0.0
    %177 = vmatpush.msra.mxu0 0.0
    %178 = vmatpush.msra.mxu0 %v35
    %179 = vmatpush.msra.mxu0 %v34
    %180 = vmatpush.msra.mxu0 %v33
    %181 = vmatpush.msra.mxu0 %v32
    %182 = vmatmul.f32.gmra.mxu0 %v92
    %v183 = vpop.f32.mrf.mxu0
    %v184 = vadd.f32 0.0, %v183
    %185 = vmatmul.f32.gmra.mxu0 %v95
    %v186 = vpop.f32.mrf.mxu0
    %v187 = vadd.f32 0.0, %v186
    %188 = vdwg.mxu0
    %189 = vmatpush.msra.mxu0 0.0
    %190 = vmatpush.msra.mxu0 0.0
    %191 = vmatpush.msra.mxu0 0.0
    %192 = vmatpush.msra.mxu0 0.0
    %193 = vmatpush.msra.mxu0 0.0
    %194 = vmatpush.msra.mxu0 0.0
    %195 = vmatpush.msra.mxu0 0.0
    %196 = vmatpush.msra.mxu0 0.0
    %197 = vmatpush.msra.mxu0 0.0
    %198 = vmatpush.msra.mxu0 0.0
    %199 = vmatpush.msra.mxu0 0.0
    %200 = vmatpush.msra.mxu0 0.0
    %201 = vmatpush.msra.mxu0 %v39
    %202 = vmatpush.msra.mxu0 %v38
    %203 = vmatpush.msra.mxu0 %v37
    %204 = vmatpush.msra.mxu0 %v36
    %205 = vmatmul.f32.gmra.mxu0 %v92
    %v206 = vpop.f32.mrf.mxu0
    %v207 = vadd.f32 0.0, %v206
    %208 = vmatmul.f32.gmra.mxu0 %v95
    %v209 = vpop.f32.mrf.mxu0
    %v210 = vadd.f32 0.0, %v209
    %211 = vdwg.mxu0
    %212 = vmatpush.msra.mxu0 0.0
    %213 = vmatpush.msra.mxu0 0.0
    %214 = vmatpush.msra.mxu0 0.0
    %215 = vmatpush.msra.mxu0 0.0
    %216 = vmatpush.msra.mxu0 0.0
    %217 = vmatpush.msra.mxu0 0.0
    %218 = vmatpush.msra.mxu0 0.0
    %219 = vmatpush.msra.mxu0 0.0
    %220 = vmatpush.msra.mxu0 0.0
    %221 = vmatpush.msra.mxu0 0.0
    %222 = vmatpush.msra.mxu0 0.0
    %223 = vmatpush.msra.mxu0 0.0
    %224 = vmatpush.msra.mxu0 %v43
    %225 = vmatpush.msra.mxu0 %v42
    %226 = vmatpush.msra.mxu0 %v41
    %227 = vmatpush.msra.mxu0 %v40
    %228 = vmatmul.f32.gmra.mxu0 %v92
    %v229 = vpop.f32.mrf.mxu0
    %v230 = vadd.f32 0.0, %v229
    %231 = vmatmul.f32.gmra.mxu0 %v95
    %v232 = vpop.f32.mrf.mxu0
    %v233 = vadd.f32 0.0, %v232
    %234 = vdwg.mxu0
    %235 = vmatpush.msra.mxu0 0.0
    %236 = vmatpush.msra.mxu0 0.0
    %237 = vmatpush.msra.mxu0 0.0
    %238 = vmatpush.msra.mxu0 0.0
    %239 = vmatpush.msra.mxu0 0.0
    %240 = vmatpush.msra.mxu0 0.0
    %241 = vmatpush.msra.mxu0 0.0
    %242 = vmatpush.msra.mxu0 0.0
    %243 = vmatpush.msra.mxu0 0.0
    %244 = vmatpush.msra.mxu0 0.0
    %245 = vmatpush.msra.mxu0 0.0
    %246 = vmatpush.msra.mxu0 0.0
    %247 = vmatpush.msra.mxu0 %v47
    %248 = vmatpush.msra.mxu0 %v46
    %249 = vmatpush.msra.mxu0 %v45
    %250 = vmatpush.msra.mxu0 %v44
    %251 = vmatmul.f32.gmra.mxu0 %v92
    %v252 = vpop.f32.mrf.mxu0
    %v253 = vadd.f32 0.0, %v252
    %254 = vmatmul.f32.gmra.mxu0 %v95
    %v255 = vpop.f32.mrf.mxu0
    %v256 = vadd.f32 0.0, %v255
    %257 = vdwg.mxu0
    %258 = vmatpush.msra.mxu0 0.0
    %259 = vmatpush.msra.mxu0 0.0
    %260 = vmatpush.msra.mxu0 0.0
    %261 = vmatpush.msra.mxu0 0.0
    %262 = vmatpush.msra.mxu0 0.0
    %263 = vmatpush.msra.mxu0 0.0
    %264 = vmatpush.msra.mxu0 0.0
    %265 = vmatpush.msra.mxu0 0.0
    %266 = vmatpush.msra.mxu0 0.0
    %267 = vmatpush.msra.mxu0 0.0
    %268 = vmatpush.msra.mxu0 0.0
    %269 = vmatpush.msra.mxu0 0.0
    %270 = vmatpush.msra.mxu0 %v51
    %271 = vmatpush.msra.mxu0 %v50
    %272 = vmatpush.msra.mxu0 %v49
    %273 = vmatpush.msra.mxu0 %v48
    %274 = vmatmul.f32.gmra.mxu0 %v92
    %v275 = vpop.f32.mrf.mxu0
    %v276 = vadd.f32 0.0, %v275
    %277 = vmatmul.f32.gmra.mxu0 %v95
    %v278 = vpop.f32.mrf.mxu0
    %v279 = vadd.f32 0.0, %v278
    %280 = vdwg.mxu0
    %281 = vmatpush.msra.mxu0 0.0
    %282 = vmatpush.msra.mxu0 0.0
    %283 = vmatpush.msra.mxu0 0.0
    %284 = vmatpush.msra.mxu0 0.0
    %285 = vmatpush.msra.mxu0 0.0
    %286 = vmatpush.msra.mxu0 0.0
    %287 = vmatpush.msra.mxu0 0.0
    %288 = vmatpush.msra.mxu0 0.0
    %289 = vmatpush.msra.mxu0 0.0
    %290 = vmatpush.msra.mxu0 0.0
    %291 = vmatpush.msra.mxu0 0.0
    %292 = vmatpush.msra.mxu0 0.0
    %293 = vmatpush.msra.mxu0 %v55
    %294 = vmatpush.msra.mxu0 %v54
    %295 = vmatpush.msra.mxu0 %v53
    %296 = vmatpush.msra.mxu0 %v52
    %297 = vmatmul.f32.gmra.mxu0 %v92
    %v298 = vpop.f32.mrf.mxu0
    %v299 = vadd.f32 0.0, %v298
    %300 = vmatmul.f32.gmra.mxu0 %v95
    %v301 = vpop.f32.mrf.mxu0
    %v302 = vadd.f32 0.0, %v301
    %303 = vdwg.mxu0
    %304 = vmatpush.msra.mxu0 0.0
    %305 = vmatpush.msra.mxu0 0.0
    %306 = vmatpush.msra.mxu0 0.0
    %307 = vmatpush.msra.mxu0 0.0
    %308 = vmatpush.msra.mxu0 0.0
    %309 = vmatpush.msra.mxu0 0.0
    %310 = vmatpush.msra.mxu0 0.0
    %311 = vmatpush.msra.mxu0 0.0
    %312 = vmatpush.msra.mxu0 0.0
    %313 = vmatpush.msra.mxu0 0.0
    %314 = vmatpush.msra.mxu0 0.0
    %315 = vmatpush.msra.mxu0 0.0
    %316 = vmatpush.msra.mxu0 %v59
    %317 = vmatpush.msra.mxu0 %v58
    %318 = vmatpush.msra.mxu0 %v57
    %319 = vmatpush.msra.mxu0 %v56
    %320 = vmatmul.f32.gmra.mxu0 %v92
    %v321 = vpop.f32.mrf.mxu0
    %v322 = vadd.f32 0.0, %v321
    %323 = vmatmul.f32.gmra.mxu0 %v95
    %v324 = vpop.f32.mrf.mxu0
    %v325 = vadd.f32 0.0, %v324
    %326 = vdwg.mxu0
    %327 = vmatpush.msra.mxu0 0.0
    %328 = vmatpush.msra.mxu0 0.0
    %329 = vmatpush.msra.mxu0 0.0
    %330 = vmatpush.msra.mxu0 0.0
    %331 = vmatpush.msra.mxu0 0.0
    %332 = vmatpush.msra.mxu0 0.0
    %333 = vmatpush.msra.mxu0 0.0
    %334 = vmatpush.msra.mxu0 0.0
    %335 = vmatpush.msra.mxu0 0.0
    %336 = vmatpush.msra.mxu0 0.0
    %337 = vmatpush.msra.mxu0 0.0
    %338 = vmatpush.msra.mxu0 0.0
    %339 = vmatpush.msra.mxu0 %v63
    %340 = vmatpush.msra.mxu0 %v62
    %341 = vmatpush.msra.mxu0 %v61
    %342 = vmatpush.msra.mxu0 %v60
    %343 = vmatmul.f32.gmra.mxu0 %v92
    %v344 = vpop.f32.mrf.mxu0
    %v345 = vadd.f32 0.0, %v344
    %346 = vmatmul.f32.gmra.mxu0 %v95
    %v347 = vpop.f32.mrf.mxu0
    %v348 = vadd.f32 0.0, %v347
    %349 = vdwg.mxu0
    %350 = vmatpush.msra.mxu0 0.0
    %351 = vmatpush.msra.mxu0 0.0
    %352 = vmatpush.msra.mxu0 0.0
    %353 = vmatpush.msra.mxu0 0.0
    %354 = vmatpush.msra.mxu0 0.0
    %355 = vmatpush.msra.mxu0 0.0
    %356 = vmatpush.msra.mxu0 0.0
    %357 = vmatpush.msra.mxu0 0.0
    %358 = vmatpush.msra.mxu0 0.0
    %359 = vmatpush.msra.mxu0 0.0
    %360 = vmatpush.msra.mxu0 0.0
    %361 = vmatpush.msra.mxu0 0.0
    %362 = vmatpush.msra.mxu0 %v67
    %363 = vmatpush.msra.mxu0 %v66
    %364 = vmatpush.msra.mxu0 %v65
    %365 = vmatpush.msra.mxu0 %v64
    %366 = vmatmul.f32.gmra.mxu0 %v92
    %v367 = vpop.f32.mrf.mxu0
    %v368 = vadd.f32 0.0, %v367
    %369 = vmatmul.f32.gmra.mxu0 %v95
    %v370 = vpop.f32.mrf.mxu0
    %v371 = vadd.f32 0.0, %v370
    %372 = vdwg.mxu0
    %v373 = vld [vmem:[%s3] sm:$0xff]
    %v374 = vld [vmem:[%s3 + $0x8] sm:$0xff]
    %vm375 = vcmask 64512
    %v377 = vsel %vm375, %v115, 0
    %v380 = vsel %vm375, %v118, 0
    %v383 = vsel %vm375, %v207, 0
    %v386 = vsel %vm375, %v210, 0
    %388 = vmatpush.xpose.msra.mxu0 0.0
    %389 = vmatpush.xpose.msra.mxu0 0.0
    %390 = vmatpush.xpose.msra.mxu0 0.0
    %391 = vmatpush.xpose.msra.mxu0 0.0
    %392 = vmatpush.xpose.msra.mxu0 0.0
    %393 = vmatpush.xpose.msra.mxu0 0.0
    %394 = vmatpush.xpose.msra.mxu0 0.0
    %395 = vmatpush.xpose.msra.mxu0 0.0
    %396 = vmatpush.xpose.msra.mxu0 0.0
    %397 = vmatpush.xpose.msra.mxu0 0.0
    %398 = vmatpush.xpose.msra.mxu0 0.0
    %399 = vmatpush.xpose.msra.mxu0 0.0
    %400 = vmatpush.xpose.msra.mxu0 0.0
    %401 = vmatpush.xpose.msra.mxu0 0.0
    %402 = vmatpush.xpose.msra.mxu0 %v386
    %403 = vmatpush.xpose.msra.mxu0 %v383
    %404 = vmatmul.f32.gmra.mxu0 %v377
    %v405 = vpop.f32.mrf.mxu0
    %v406 = vadd.f32 %v373, %v405
    %407 = vmatmul.f32.gmra.mxu0 %v380
    %v408 = vpop.f32.mrf.mxu0
    %v409 = vadd.f32 %v374, %v408
    %410 = vdwg.mxu0
    %v412 = vsel %vm375, %v138, 0
    %v415 = vsel %vm375, %v141, 0
    %v418 = vsel %vm375, %v230, 0
    %v421 = vsel %vm375, %v233, 0
    %423 = vmatpush.xpose.msra.mxu0 0.0
    %424 = vmatpush.xpose.msra.mxu0 0.0
    %425 = vmatpush.xpose.msra.mxu0 0.0
    %426 = vmatpush.xpose.msra.mxu0 0.0
    %427 = vmatpush.xpose.msra.mxu0 0.0
    %428 = vmatpush.xpose.msra.mxu0 0.0
    %429 = vmatpush.xpose.msra.mxu0 0.0
    %430 = vmatpush.xpose.msra.mxu0 0.0
    %431 = vmatpush.xpose.msra.mxu0 0.0
    %432 = vmatpush.xpose.msra.mxu0 0.0
    %433 = vmatpush.xpose.msra.mxu0 0.0
    %434 = vmatpush.xpose.msra.mxu0 0.0
    %435 = vmatpush.xpose.msra.mxu0 0.0
    %436 = vmatpush.xpose.msra.mxu0 0.0
    %437 = vmatpush.xpose.msra.mxu0 %v421
    %438 = vmatpush.xpose.msra.mxu0 %v418
    %439 = vmatmul.f32.gmra.mxu0 %v412
    %v440 = vpop.f32.mrf.mxu0
    %v441 = vadd.f32 %v373, %v440
    %442 = vmatmul.f32.gmra.mxu0 %v415
    %v443 = vpop.f32.mrf.mxu0
    %v444 = vadd.f32 %v374, %v443
    %445 = vdwg.mxu0
    %v447 = vsel %vm375, %v161, 0
    %v450 = vsel %vm375, %v164, 0
    %v453 = vsel %vm375, %v253, 0
    %v456 = vsel %vm375, %v256, 0
    %458 = vmatpush.xpose.msra.mxu0 0.0
    %459 = vmatpush.xpose.msra.mxu0 0.0
    %460 = vmatpush.xpose.msra.mxu0 0.0
    %461 = vmatpush.xpose.msra.mxu0 0.0
    %462 = vmatpush.xpose.msra.mxu0 0.0
    %463 = vmatpush.xpose.msra.mxu0 0.0
    %464 = vmatpush.xpose.msra.mxu0 0.0
    %465 = vmatpush.xpose.msra.mxu0 0.0
    %466 = vmatpush.xpose.msra.mxu0 0.0
    %467 = vmatpush.xpose.msra.mxu0 0.0
    %468 = vmatpush.xpose.msra.mxu0 0.0
    %469 = vmatpush.xpose.msra.mxu0 0.0
    %470 = vmatpush.xpose.msra.mxu0 0.0
    %471 = vmatpush.xpose.msra.mxu0 0.0
    %472 = vmatpush.xpose.msra.mxu0 %v456
    %473 = vmatpush.xpose.msra.mxu0 %v453
    %474 = vmatmul.f32.gmra.mxu0 %v447
    %v475 = vpop.f32.mrf.mxu0
    %v476 = vadd.f32 %v373, %v475
    %477 = vmatmul.f32.gmra.mxu0 %v450
    %v478 = vpop.f32.mrf.mxu0
    %v479 = vadd.f32 %v374, %v478
    %480 = vdwg.mxu0
    %v482 = vsel %vm375, %v184, 0
    %v485 = vsel %vm375, %v187, 0
    %v488 = vsel %vm375, %v276, 0
    %v491 = vsel %vm375, %v279, 0
    %493 = vmatpush.xpose.msra.mxu0 0.0
    %494 = vmatpush.xpose.msra.mxu0 0.0
    %495 = vmatpush.xpose.msra.mxu0 0.0
    %496 = vmatpush.xpose.msra.mxu0 0.0
    %497 = vmatpush.xpose.msra.mxu0 0.0
    %498 = vmatpush.xpose.msra.mxu0 0.0
    %499 = vmatpush.xpose.msra.mxu0 0.0
    %500 = vmatpush.xpose.msra.mxu0 0.0
    %501 = vmatpush.xpose.msra.mxu0 0.0
    %502 = vmatpush.xpose.msra.mxu0 0.0
    %503 = vmatpush.xpose.msra.mxu0 0.0
    %504 = vmatpush.xpose.msra.mxu0 0.0
    %505 = vmatpush.xpose.msra.mxu0 0.0
    %506 = vmatpush.xpose.msra.mxu0 0.0
    %507 = vmatpush.xpose.msra.mxu0 %v491
    %508 = vmatpush.xpose.msra.mxu0 %v488
    %509 = vmatmul.f32.gmra.mxu0 %v482
    %v510 = vpop.f32.mrf.mxu0
    %v511 = vadd.f32 %v373, %v510
    %512 = vmatmul.f32.gmra.mxu0 %v485
    %v513 = vpop.f32.mrf.mxu0
    %v514 = vadd.f32 %v374, %v513
    %515 = vdwg.mxu0
    %vm516 = vcmask 130048
    %v517 = vsel %vm516, %v406, -inf
    %518 = vmax.xlane.f32.xlu0 %v517
    %v519 = vpop.xlane.xlu0 %518
    %v520 = vsel %vm516, %v409, -inf
    %521 = vmax.xlane.f32.xlu0 %v520
    %v522 = vpop.xlane.xlu0 %521
    %v523 = vsel %vm516, %v441, -inf
    %524 = vmax.xlane.f32.xlu0 %v523
    %v525 = vpop.xlane.xlu0 %524
    %v526 = vsel %vm516, %v444, -inf
    %527 = vmax.xlane.f32.xlu0 %v526
    %v528 = vpop.xlane.xlu0 %527
    %v529 = vsel %vm516, %v476, -inf
    %530 = vmax.xlane.f32.xlu0 %v529
    %v531 = vpop.xlane.xlu0 %530
    %v532 = vsel %vm516, %v479, -inf
    %533 = vmax.xlane.f32.xlu0 %v532
    %v534 = vpop.xlane.xlu0 %533
    %v535 = vsel %vm516, %v511, -inf
    %536 = vmax.xlane.f32.xlu0 %v535
    %v537 = vpop.xlane.xlu0 %536
    %v538 = vsel %vm516, %v514, -inf
    %539 = vmax.xlane.f32.xlu0 %v538
    %v540 = vpop.xlane.xlu0 %539
    %v541 = vsub.f32 %v406, %v519
    %v542 = vsub.f32 %v409, %v522
    %v543 = vsub.f32 %v441, %v525
    %v544 = vsub.f32 %v444, %v528
    %v545 = vsub.f32 %v476, %v531
    %v546 = vsub.f32 %v479, %v534
    %v547 = vsub.f32 %v511, %v537
    %v548 = vsub.f32 %v514, %v540
    %v549 = vmul.f32 %v541, 1.442695
    %v550 = vpow.pop %v549
    %v551 = vmul.f32 %v542, 1.442695
    %v552 = vpow.pop %v551
    %v553 = vmul.f32 %v543, 1.442695
    %v554 = vpow.pop %v553
    %v555 = vmul.f32 %v544, 1.442695
    %v556 = vpow.pop %v555
    %v557 = vmul.f32 %v545, 1.442695
    %v558 = vpow.pop %v557
    %v559 = vmul.f32 %v546, 1.442695
    %v560 = vpow.pop %v559
    %v561 = vmul.f32 %v547, 1.442695
    %v562 = vpow.pop %v561
    %v563 = vmul.f32 %v548, 1.442695
    %v564 = vpow.pop %v563
    %v565 = vsel %vm516, %v550, 0.0
    %566 = vadd.xlane.f32.xlu0 %v565
    %v567 = vpop.xlane.xlu0 %566
    %v568 = vsel %vm516, %v552, 0.0
    %569 = vadd.xlane.f32.xlu0 %v568
    %v570 = vpop.xlane.xlu0 %569
    %v571 = vsel %vm516, %v554, 0.0
    %572 = vadd.xlane.f32.xlu0 %v571
    %v573 = vpop.xlane.xlu0 %572
    %v574 = vsel %vm516, %v556, 0.0
    %575 = vadd.xlane.f32.xlu0 %v574
    %v576 = vpop.xlane.xlu0 %575
    %v577 = vsel %vm516, %v558, 0.0
    %578 = vadd.xlane.f32.xlu0 %v577
    %v579 = vpop.xlane.xlu0 %578
    %v580 = vsel %vm516, %v560, 0.0
    %581 = vadd.xlane.f32.xlu0 %v580
    %v582 = vpop.xlane.xlu0 %581
    %v583 = vsel %vm516, %v562, 0.0
    %584 = vadd.xlane.f32.xlu0 %v583
    %v585 = vpop.xlane.xlu0 %584
    %v586 = vsel %vm516, %v564, 0.0
    %587 = vadd.xlane.f32.xlu0 %v586
    %v588 = vpop.xlane.xlu0 %587
    %v589 = vrcp.pop %v567
    %v590 = vmul.f32 %v567, %v589
    %v591 = vsub.f32 1.0, %v590
    %v592 = vmul.f32 %v589, %v591
    %v593 = vadd.f32 %v589, %v592
    %vm594 = vweird.f32 %v567
    %vm595 = vweird.f32 %v589
    %vm596 = vmor %vm594, %vm595
    %v597 = vsel %vm596, %v589, %v593
    %v598 = vand.u32 2147483647, %v567
    %vm599 = vcmp.eq.f32.partialorder %v598, 8.507059e+37
    %v600 = vand.u32 %v567, 2147483648
    %v601 = vor.u32 1.1754944e-38, %v600
    %v602 = vsel %vm599, %v601, %v597
    %v603 = vmul.f32 %v550, %v602
    %v604 = vrcp.pop %v570
    %v605 = vmul.f32 %v570, %v604
    %v606 = vsub.f32 1.0, %v605
    %v607 = vmul.f32 %v604, %v606
    %v608 = vadd.f32 %v604, %v607
    %vm609 = vweird.f32 %v570
    %vm610 = vweird.f32 %v604
    %vm611 = vmor %vm609, %vm610
    %v612 = vsel %vm611, %v604, %v608
    %v613 = vand.u32 2147483647, %v570
    %vm614 = vcmp.eq.f32.partialorder %v613, 8.507059e+37
    %v615 = vand.u32 %v570, 2147483648
    %v616 = vor.u32 1.1754944e-38, %v615
    %v617 = vsel %vm614, %v616, %v612
    %v618 = vmul.f32 %v552, %v617
    %v619 = vrcp.pop %v573
    %v620 = vmul.f32 %v573, %v619
    %v621 = vsub.f32 1.0, %v620
    %v622 = vmul.f32 %v619, %v621
    %v623 = vadd.f32 %v619, %v622
    %vm624 = vweird.f32 %v573
    %vm625 = vweird.f32 %v619
    %vm626 = vmor %vm624, %vm625
    %v627 = vsel %vm626, %v619, %v623
    %v628 = vand.u32 2147483647, %v573
    %vm629 = vcmp.eq.f32.partialorder %v628, 8.507059e+37
    %v630 = vand.u32 %v573, 2147483648
    %v631 = vor.u32 1.1754944e-38, %v630
    %v632 = vsel %vm629, %v631, %v627
    %v633 = vmul.f32 %v554, %v632
    %v634 = vrcp.pop %v576
    %v635 = vmul.f32 %v576, %v634
    %v636 = vsub.f32 1.0, %v635
    %v637 = vmul.f32 %v634, %v636
    %v638 = vadd.f32 %v634, %v637
    %vm639 = vweird.f32 %v576
    %vm640 = vweird.f32 %v634
    %vm641 = vmor %vm639, %vm640
    %v642 = vsel %vm641, %v634, %v638
    %v643 = vand.u32 2147483647, %v576
    %vm644 = vcmp.eq.f32.partialorder %v643, 8.507059e+37
    %v645 = vand.u32 %v576, 2147483648
    %v646 = vor.u32 1.1754944e-38, %v645
    %v647 = vsel %vm644, %v646, %v642
    %v648 = vmul.f32 %v556, %v647
    %v649 = vrcp.pop %v579
    %v650 = vmul.f32 %v579, %v649
    %v651 = vsub.f32 1.0, %v650
    %v652 = vmul.f32 %v649, %v651
    %v653 = vadd.f32 %v649, %v652
    %vm654 = vweird.f32 %v579
    %vm655 = vweird.f32 %v649
    %vm656 = vmor %vm654, %vm655
    %v657 = vsel %vm656, %v649, %v653
    %v658 = vand.u32 2147483647, %v579
    %vm659 = vcmp.eq.f32.partialorder %v658, 8.507059e+37
    %v660 = vand.u32 %v579, 2147483648
    %v661 = vor.u32 1.1754944e-38, %v660
    %v662 = vsel %vm659, %v661, %v657
    %v663 = vmul.f32 %v558, %v662
    %v664 = vrcp.pop %v582
    %v665 = vmul.f32 %v582, %v664
    %v666 = vsub.f32 1.0, %v665
    %v667 = vmul.f32 %v664, %v666
    %v668 = vadd.f32 %v664, %v667
    %vm669 = vweird.f32 %v582
    %vm670 = vweird.f32 %v664
    %vm671 = vmor %vm669, %vm670
    %v672 = vsel %vm671, %v664, %v668
    %v673 = vand.u32 2147483647, %v582
    %vm674 = vcmp.eq.f32.partialorder %v673, 8.507059e+37
    %v675 = vand.u32 %v582, 2147483648
    %v676 = vor.u32 1.1754944e-38, %v675
    %v677 = vsel %vm674, %v676, %v672
    %v678 = vmul.f32 %v560, %v677
    %v679 = vrcp.pop %v585
    %v680 = vmul.f32 %v585, %v679
    %v681 = vsub.f32 1.0, %v680
    %v682 = vmul.f32 %v679, %v681
    %v683 = vadd.f32 %v679, %v682
    %vm684 = vweird.f32 %v585
    %vm685 = vweird.f32 %v679
    %vm686 = vmor %vm684, %vm685
    %v687 = vsel %vm686, %v679, %v683
    %v688 = vand.u32 2147483647, %v585
    %vm689 = vcmp.eq.f32.partialorder %v688, 8.507059e+37
    %v690 = vand.u32 %v585, 2147483648
    %v691 = vor.u32 1.1754944e-38, %v690
    %v692 = vsel %vm689, %v691, %v687
    %v693 = vmul.f32 %v562, %v692
    %v694 = vrcp.pop %v588
    %v695 = vmul.f32 %v588, %v694
    %v696 = vsub.f32 1.0, %v695
    %v697 = vmul.f32 %v694, %v696
    %v698 = vadd.f32 %v694, %v697
    %vm699 = vweird.f32 %v588
    %vm700 = vweird.f32 %v694
    %vm701 = vmor %vm699, %vm700
    %v702 = vsel %vm701, %v694, %v698
    %v703 = vand.u32 2147483647, %v588
    %vm704 = vcmp.eq.f32.partialorder %v703, 8.507059e+37
    %v705 = vand.u32 %v588, 2147483648
    %v706 = vor.u32 1.1754944e-38, %v705
    %v707 = vsel %vm704, %v706, %v702
    %v708 = vmul.f32 %v564, %v707
    %v710 = vsel %vm516, %v603, 0
    %v713 = vsel %vm516, %v618, 0
    %715 = vmatpush.msra.mxu0 0.0
    %716 = vmatpush.msra.mxu0 0.0
    %717 = vmatpush.msra.mxu0 0.0
    %718 = vmatpush.msra.mxu0 0.0
    %719 = vmatpush.msra.mxu0 0.0
    %720 = vmatpush.msra.mxu0 0.0
    %721 = vmatpush.msra.mxu0 0.0
    %722 = vmatpush.msra.mxu0 0.0
    %723 = vmatpush.msra.mxu0 0.0
    %724 = vmatpush.msra.mxu0 0.0
    %725 = vmatpush.msra.mxu0 0.0
    %726 = vmatpush.msra.mxu0 0.0
    %727 = vmatpush.msra.mxu0 0.0
    %728 = vmatpush.msra.mxu0 0.0
    %729 = vmatpush.msra.mxu0 %v302
    %730 = vmatpush.msra.mxu0 %v299
    %731 = vmatmul.f32.gmra.mxu0 %v710
    %v732 = vpop.f32.mrf.mxu0
    %v733 = vadd.f32 0.0, %v732
    %734 = vmatmul.f32.gmra.mxu0 %v713
    %v735 = vpop.f32.mrf.mxu0
    %v736 = vadd.f32 0.0, %v735
    %737 = vdwg.mxu0
    %v739 = vsel %vm516, %v633, 0
    %v742 = vsel %vm516, %v648, 0
    %744 = vmatpush.msra.mxu0 0.0
    %745 = vmatpush.msra.mxu0 0.0
    %746 = vmatpush.msra.mxu0 0.0
    %747 = vmatpush.msra.mxu0 0.0
    %748 = vmatpush.msra.mxu0 0.0
    %749 = vmatpush.msra.mxu0 0.0
    %750 = vmatpush.msra.mxu0 0.0
    %751 = vmatpush.msra.mxu0 0.0
    %752 = vmatpush.msra.mxu0 0.0
    %753 = vmatpush.msra.mxu0 0.0
    %754 = vmatpush.msra.mxu0 0.0
    %755 = vmatpush.msra.mxu0 0.0
    %756 = vmatpush.msra.mxu0 0.0
    %757 = vmatpush.msra.mxu0 0.0
    %758 = vmatpush.msra.mxu0 %v325
    %759 = vmatpush.msra.mxu0 %v322
    %760 = vmatmul.f32.gmra.mxu0 %v739
    %v761 = vpop.f32.mrf.mxu0
    %v762 = vadd.f32 0.0, %v761
    %763 = vmatmul.f32.gmra.mxu0 %v742
    %v764 = vpop.f32.mrf.mxu0
    %v765 = vadd.f32 0.0, %v764
    %766 = vdwg.mxu0
    %v768 = vsel %vm516, %v663, 0
    %v771 = vsel %vm516, %v678, 0
    %773 = vmatpush.msra.mxu0 0.0
    %774 = vmatpush.msra.mxu0 0.0
    %775 = vmatpush.msra.mxu0 0.0
    %776 = vmatpush.msra.mxu0 0.0
    %777 = vmatpush.msra.mxu0 0.0
    %778 = vmatpush.msra.mxu0 0.0
    %779 = vmatpush.msra.mxu0 0.0
    %780 = vmatpush.msra.mxu0 0.0
    %781 = vmatpush.msra.mxu0 0.0
    %782 = vmatpush.msra.mxu0 0.0
    %783 = vmatpush.msra.mxu0 0.0
    %784 = vmatpush.msra.mxu0 0.0
    %785 = vmatpush.msra.mxu0 0.0
    %786 = vmatpush.msra.mxu0 0.0
    %787 = vmatpush.msra.mxu0 %v348
    %788 = vmatpush.msra.mxu0 %v345
    %789 = vmatmul.f32.gmra.mxu0 %v768
    %v790 = vpop.f32.mrf.mxu0
    %v791 = vadd.f32 0.0, %v790
    %792 = vmatmul.f32.gmra.mxu0 %v771
    %v793 = vpop.f32.mrf.mxu0
    %v794 = vadd.f32 0.0, %v793
    %795 = vdwg.mxu0
    %v797 = vsel %vm516, %v693, 0
    %v800 = vsel %vm516, %v708, 0
    %802 = vmatpush.msra.mxu0 0.0
    %803 = vmatpush.msra.mxu0 0.0
    %804 = vmatpush.msra.mxu0 0.0
    %805 = vmatpush.msra.mxu0 0.0
    %806 = vmatpush.msra.mxu0 0.0
    %807 = vmatpush.msra.mxu0 0.0
    %808 = vmatpush.msra.mxu0 0.0
    %809 = vmatpush.msra.mxu0 0.0
    %810 = vmatpush.msra.mxu0 0.0
    %811 = vmatpush.msra.mxu0 0.0
    %812 = vmatpush.msra.mxu0 0.0
    %813 = vmatpush.msra.mxu0 0.0
    %814 = vmatpush.msra.mxu0 0.0
    %815 = vmatpush.msra.mxu0 0.0
    %816 = vmatpush.msra.mxu0 %v371
    %817 = vmatpush.msra.mxu0 %v368
    %818 = vmatmul.f32.gmra.mxu0 %v797
    %v819 = vpop.f32.mrf.mxu0
    %v820 = vadd.f32 0.0, %v819
    %821 = vmatmul.f32.gmra.mxu0 %v800
    %v822 = vpop.f32.mrf.mxu0
    %v823 = vadd.f32 0.0, %v822
    %824 = vdwg.mxu0
    %v826 = vsel %vm375, %v733, 0
    %v829 = vsel %vm375, %v736, 0
    %v832 = vsel %vm375, %v68, 0
    %v835 = vsel %vm375, %v69, 0
    %v838 = vsel %vm375, %v70, 0
    %v841 = vsel %vm375, %v71, 0
    %843 = vmatpush.xpose.msra.mxu0 0.0
    %844 = vmatpush.xpose.msra.mxu0 0.0
    %845 = vmatpush.xpose.msra.mxu0 0.0
    %846 = vmatpush.xpose.msra.mxu0 0.0
    %847 = vmatpush.xpose.msra.mxu0 0.0
    %848 = vmatpush.xpose.msra.mxu0 0.0
    %849 = vmatpush.xpose.msra.mxu0 0.0
    %850 = vmatpush.xpose.msra.mxu0 0.0
    %851 = vmatpush.xpose.msra.mxu0 0.0
    %852 = vmatpush.xpose.msra.mxu0 0.0
    %853 = vmatpush.xpose.msra.mxu0 0.0
    %854 = vmatpush.xpose.msra.mxu0 0.0
    %855 = vmatpush.xpose.msra.mxu0 %v841
    %856 = vmatpush.xpose.msra.mxu0 %v838
    %857 = vmatpush.xpose.msra.mxu0 %v835
    %858 = vmatpush.xpose.msra.mxu0 %v832
    %859 = vmatmul.f32.gmra.mxu0 %v826
    %v860 = vpop.f32.mrf.mxu0
    %v861 = vadd.f32 0.0, %v860
    %862 = vmatmul.f32.gmra.mxu0 %v829
    %v863 = vpop.f32.mrf.mxu0
    %v864 = vadd.f32 0.0, %v863
    %865 = vdwg.mxu0
    %v867 = vsel %vm375, %v762, 0
    %v870 = vsel %vm375, %v765, 0
    %v873 = vsel %vm375, %v72, 0
    %v876 = vsel %vm375, %v73, 0
    %v879 = vsel %vm375, %v74, 0
    %v882 = vsel %vm375, %v75, 0
    %884 = vmatpush.xpose.msra.mxu0 0.0
    %885 = vmatpush.xpose.msra.mxu0 0.0
    %886 = vmatpush.xpose.msra.mxu0 0.0
    %887 = vmatpush.xpose.msra.mxu0 0.0
    %888 = vmatpush.xpose.msra.mxu0 0.0
    %889 = vmatpush.xpose.msra.mxu0 0.0
    %890 = vmatpush.xpose.msra.mxu0 0.0
    %891 = vmatpush.xpose.msra.mxu0 0.0
    %892 = vmatpush.xpose.msra.mxu0 0.0
    %893 = vmatpush.xpose.msra.mxu0 0.0
    %894 = vmatpush.xpose.msra.mxu0 0.0
    %895 = vmatpush.xpose.msra.mxu0 0.0
    %896 = vmatpush.xpose.msra.mxu0 %v882
    %897 = vmatpush.xpose.msra.mxu0 %v879
    %898 = vmatpush.xpose.msra.mxu0 %v876
    %899 = vmatpush.xpose.msra.mxu0 %v873
    %900 = vmatmul.f32.gmra.mxu0 %v867
    %v901 = vpop.f32.mrf.mxu0
    %v902 = vadd.f32 0.0, %v901
    %903 = vmatmul.f32.gmra.mxu0 %v870
    %v904 = vpop.f32.mrf.mxu0
    %v905 = vadd.f32 0.0, %v904
    %906 = vdwg.mxu0
    %v908 = vsel %vm375, %v791, 0
    %v911 = vsel %vm375, %v794, 0
    %v914 = vsel %vm375, %v76, 0
    %v917 = vsel %vm375, %v77, 0
    %v920 = vsel %vm375, %v78, 0
    %v923 = vsel %vm375, %v79, 0
    %925 = vmatpush.xpose.msra.mxu0 0.0
    %926 = vmatpush.xpose.msra.mxu0 0.0
    %927 = vmatpush.xpose.msra.mxu0 0.0
    %928 = vmatpush.xpose.msra.mxu0 0.0
    %929 = vmatpush.xpose.msra.mxu0 0.0
    %930 = vmatpush.xpose.msra.mxu0 0.0
    %931 = vmatpush.xpose.msra.mxu0 0.0
    %932 = vmatpush.xpose.msra.mxu0 0.0
    %933 = vmatpush.xpose.msra.mxu0 0.0
    %934 = vmatpush.xpose.msra.mxu0 0.0
    %935 = vmatpush.xpose.msra.mxu0 0.0
    %936 = vmatpush.xpose.msra.mxu0 0.0
    %937 = vmatpush.xpose.msra.mxu0 %v923
    %938 = vmatpush.xpose.msra.mxu0 %v920
    %939 = vmatpush.xpose.msra.mxu0 %v917
    %940 = vmatpush.xpose.msra.mxu0 %v914
    %941 = vmatmul.f32.gmra.mxu0 %v908
    %v942 = vpop.f32.mrf.mxu0
    %v943 = vadd.f32 0.0, %v942
    %944 = vmatmul.f32.gmra.mxu0 %v911
    %v945 = vpop.f32.mrf.mxu0
    %v946 = vadd.f32 0.0, %v945
    %947 = vdwg.mxu0
    %v949 = vsel %vm375, %v820, 0
    %v952 = vsel %vm375, %v823, 0
    %v955 = vsel %vm375, %v80, 0
    %v958 = vsel %vm375, %v81, 0
    %v961 = vsel %vm375, %v82, 0
    %v964 = vsel %vm375, %v83, 0
    %966 = vmatpush.xpose.msra.mxu0 0.0
    %967 = vmatpush.xpose.msra.mxu0 0.0
    %968 = vmatpush.xpose.msra.mxu0 0.0
    %969 = vmatpush.xpose.msra.mxu0 0.0
    %970 = vmatpush.xpose.msra.mxu0 0.0
    %971 = vmatpush.xpose.msra.mxu0 0.0
    %972 = vmatpush.xpose.msra.mxu0 0.0
    %973 = vmatpush.xpose.msra.mxu0 0.0
    %974 = vmatpush.xpose.msra.mxu0 0.0
    %975 = vmatpush.xpose.msra.mxu0 0.0
    %976 = vmatpush.xpose.msra.mxu0 0.0
    %977 = vmatpush.xpose.msra.mxu0 0.0
    %978 = vmatpush.xpose.msra.mxu0 %v964
    %979 = vmatpush.xpose.msra.mxu0 %v961
    %980 = vmatpush.xpose.msra.mxu0 %v958
    %981 = vmatpush.xpose.msra.mxu0 %v955
    %982 = vmatmul.f32.gmra.mxu0 %v949
    %v983 = vpop.f32.mrf.mxu0
    %v984 = vadd.f32 0.0, %v983
    %985 = vmatmul.f32.gmra.mxu0 %v952
    %v986 = vpop.f32.mrf.mxu0
    %v987 = vadd.f32 0.0, %v986
    %988 = vdwg.mxu0
    %v989 = vadd.f32 %v861, %v902
    %v990 = vadd.f32 %v864, %v905
    %v991 = vadd.f32 %v989, %v943
    %v992 = vadd.f32 %v990, %v946
    %v993 = vadd.f32 %v991, %v984
    %v994 = vadd.f32 %v992, %v987
    %v995 = vperm.slane %v88, 0
    %v996 = vadd.f32 %v993, %v995
    %v997 = vadd.f32 %v994, %v995
    %v998 = vmax.f32 %v996, 0.0
    %v999 = vmax.f32 %v997, 0.0
    %v1000 = vperm.slane %v89, 0
    %v1002 = vsel %vm90, %v998, 0
    %v1005 = vsel %vm90, %v999, 0
    %1007 = vmatpush.msra.mxu0 0.0
    %1008 = vmatpush.msra.mxu0 0.0
    %1009 = vmatpush.msra.mxu0 0.0
    %1010 = vmatpush.msra.mxu0 0.0
    %1011 = vmatpush.msra.mxu0 0.0
    %1012 = vmatpush.msra.mxu0 0.0
    %1013 = vmatpush.msra.mxu0 0.0
    %1014 = vmatpush.msra.mxu0 0.0
    %1015 = vmatpush.msra.mxu0 0.0
    %1016 = vmatpush.msra.mxu0 0.0
    %1017 = vmatpush.msra.mxu0 0.0
    %1018 = vmatpush.msra.mxu0 0.0
    %1019 = vmatpush.msra.mxu0 %v87
    %1020 = vmatpush.msra.mxu0 %v86
    %1021 = vmatpush.msra.mxu0 %v85
    %1022 = vmatpush.msra.mxu0 %v84
    %1023 = vmatmul.f32.gmra.mxu0 %v1002
    %v1024 = vpop.f32.mrf.mxu0
    %v1025 = vadd.f32 %v1000, %v1024
    %1026 = vmatmul.f32.gmra.mxu0 %v1005
    %v1027 = vpop.f32.mrf.mxu0
    %v1028 = vadd.f32 %v1000, %v1027
    %1029 = vdwg.mxu0
    %1030 = vst [vmem:[#allocation2] sm:$0xff] %v1025
    %1031 = vst [vmem:[#allocation2 + $0x8] sm:$0xff] %v1028
    // Predicated region
    $region18: #{small_language_model_forward.1} parent=1 // pred_check
      _
    $region19: #{small_language_model_forward.1} parent=1 // pred_check_branch
      %1033 = sbr.rel (0) target = $region21
    $region20: #{small_language_model_forward.1} parent=1 // pred_region
      %1035 = vsyncadd [#allocation3], 0
      %s1036 = sshll.u32 [#allocation2], 4
      %s1037 = int_to_ptr.vmem [resolvable:$true] %s1036
      %s1038 = sshll.u32 %s4, 4
      %s1039 = int_to_ptr.hbm [resolvable:$true] %s1038
      %1044 = dma.vmem_to_hbm [thread:$0]  %s1037, 256, %s1039, [#allocation3], 128, 128, 8
    $region21: #{small_language_model_forward.1} parent=1 // pred_fallthru
      _
    // Predicated region
    $region22: #{small_language_model_forward.1} parent=1 // pred_check
      _
    $region23: #{small_language_model_forward.1} parent=1 // pred_check_branch
      %1046 = sbr.rel (0) target = $region25
    $region24: #{small_language_model_forward.1} parent=1 // pred_region
      %1048 = dma.done [#allocation3], 256
    $region25: #{small_language_model_forward.1} parent=1 // pred_fallthru
      _
    %1049 = vsyncpa [#allocation3], 1

</llo_original>
